<compile_context>
chip_gen: v5e
topology: v5e:2x2
jax: 0.10.0
libtpu: 0.0.40
codegen_flags: <defaults>
</compile_context>

<pallas_src>
import functools

import numpy as np
import jax
import jax.numpy as jnp
from jax.experimental import pallas as pl
from jax.experimental.pallas import tpu as pltpu

_BN_EPS = 1e-5
_VMEM_LIMIT = 32 * 1024 * 1024          # explicit scoped-VMEM budget; fits v5e/v6e/v7x
_VMEM = pl.BlockSpec(memory_space=pltpu.MemorySpace.VMEM)

# Default matmul tile sizes.  Per-generation tuning notes:
#   v6e : lots of VMEM -> _TM can be raised to 512-1024 for the large-M early layers.
#   v7x : 64 MiB VMEM / 2 TCs -> keep these sizes; "parallel" M/N axes shard across TCs.
#   v5e : 4x128x128 MXU -> _TN = 128 is marginally better.
_TM = 256
_TN = 256
_TK = 512


def _round_up(x, m):
    return ((x + m - 1) // m) * m


def _mtile(m):
    """Return (padded M, tile): tile divides padded M; 16-aligned for bf16 sublanes."""
    if m >= _TM:
        return _round_up(m, _TM), _TM
    mp = _round_up(m, 16)
    return mp, mp


def _ntile(n):
    if n % _TN == 0:
        return _TN
    if n % 128 == 0:
        return 128
    return n            # e.g. Cout = 64: full-dim block (allowed), stores are masked


def _ktile(k):
    for t in (_TK, 256, 128):
        if k % t == 0:
            return t
    return k            # fallback; packed K is always a multiple of 128


# ----------------------------- Pallas kernels -----------------------------

def _mm_bn_kernel(a_ref, b_ref, s_ref, t_ref, *rest, relu, has_res):
    """Tiled o = act((a @ b) * scale + bias [+ residual]) with f32 accumulation.

    Grid = (M/tm, N/tn, K/tk); K is the last ("arbitrary") axis; acc_ref is VMEM scratch.
    """
    if has_res:
        r_ref, o_ref, acc_ref = rest
    else:
        r_ref = None
        o_ref, acc_ref = rest

    @pl.when(pl.program_id(2) == 0)
    def _():
        acc_ref[...] = jnp.zeros_like(acc_ref)

    acc_ref[...] += jnp.dot(a_ref[...], b_ref[...],
                            preferred_element_type=jnp.float32)

    @pl.when(pl.program_id(2) == pl.num_programs(2) - 1)
    def _():
        y = acc_ref[...] * s_ref[...] + t_ref[...]
        if has_res:
            y = y + r_ref[...].astype(jnp.float32)
        if relu:
            y = jnp.maximum(y, 0.0)
        o_ref[...] = y.astype(o_ref.dtype)


def _maxpool_kernel(p00_ref, p01_ref, p10_ref, p11_ref, o_ref, *, Ho, Wo):
    """3x3/s2 max pool from the four 2x2 phase-decimated planes of the padded input."""
    p00 = p00_ref[0]
    p01 = p01_ref[0]
    p10 = p10_ref[0]
    p11 = p11_ref[0]
    m = p00[0:Ho, 0:Wo, :]
    for plane, taps in ((p00, ((0, 1), (1, 0), (1, 1))),
                        (p01, ((0, 0), (1, 0))),
                        (p10, ((0, 0), (0, 1))),
                        (p11, ((0, 0),))):
        for a, b in taps:
            m = jnp.maximum(m, plane[a:a + Ho, b:b + Wo, :])
    o_ref[0] = m


def _avgpool_kernel(x_ref, o_ref):
    """Global average pool: (N, H*W, C) -> (N, C) in f32."""
    x = x_ref[...].astype(jnp.float32)
    o_ref[...] = jnp.sum(x, axis=1) * (1.0 / x.shape[1])


# ----------------------------- wrappers (glue + pallas_call) -----------------------------

def _im2col(x, kh, kw, stride, pad):
    """x: (N, H, W, C) NHWC (bf16) -> (N*Ho*Wo, kh*kw*C) patches, ordering (kh, kw, cin)."""
    if pad > 0:
        x = jnp.pad(x, ((0, 0), (pad, pad), (pad, pad), (0, 0)))
    N, Hp, Wp, C = x.shape
    Ho = (Hp - kh) // stride + 1
    Wo = (Wp - kw) // stride + 1
    if kh == 1 and kw == 1 and stride == 1:
        return x.reshape(N * Ho * Wo, C), (N, Ho, Wo)
    cols = []
    for i in range(kh):
        for j in range(kw):
            cols.append(jax.lax.slice(
                x,
                (0, i, j, 0),
                (N, i + (Ho - 1) * stride + 1, j + (Wo - 1) * stride + 1, C),
                (1, stride, stride, 1)))
    patches = jnp.stack(cols, axis=3)                 # (N, Ho, Wo, kh*kw, C)
    return patches.reshape(N * Ho * Wo, kh * kw * C), (N, Ho, Wo)


@functools.partial(jax.jit, static_argnames=("kh", "kw", "stride", "pad", "relu"))
def conv_bn(x, b_packed, scale, bias, residual=None, *, kh, kw, stride, pad, relu):
    """Conv2d (no bias) + folded BatchNorm (+ residual add) (+ ReLU) as one tiled matmul.

    b_packed: (Kp, Cout) bf16 with Kp = round_up(kh*kw*Cin, 128) (zero-padded).
    """
    cout = b_packed.shape[1]
    kp = b_packed.shape[0]

    a, (N, Ho, Wo) = _im2col(x, kh, kw, stride, pad)
    M, K = a.shape
    if K < kp:                                        # K zero-padded to 128-multiple
        a = jnp.pad(a, ((0, 0), (0, kp - K)))

    Mp, tm = _mtile(M)
    tn = _ntile(cout)
    tk = _ktile(kp)
    if Mp > M:
        a = jnp.pad(a, ((0, Mp - M), (0, 0)))

    grid = (Mp // tm, cout // tn, kp // tk)
    in_specs = [
        pl.BlockSpec((tm, tk), lambda i, j, k: (i, k)),
        pl.BlockSpec((tk, tn), lambda i, j, k: (k, j)),
        pl.BlockSpec((1, tn), lambda i, j, k: (0, j)),
        pl.BlockSpec((1, tn), lambda i, j, k: (0, j)),
    ]
    args = [a, b_packed, scale, bias]

    has_res = residual is not None
    if has_res:
        r = residual.reshape(M, cout)
        if Mp > M:
            r = jnp.pad(r, ((0, Mp - M), (0, 0)))
        in_specs.append(pl.BlockSpec((tm, tn), lambda i, j, k: (i, j)))
        args.append(r)

    out = pl.pallas_call(
        functools.partial(_mm_bn_kernel, relu=relu, has_res=has_res),
        out_shape=jax.ShapeDtypeStruct((Mp, cout), jnp.bfloat16),
        grid_spec=pltpu.PrefetchScalarGridSpec(
            num_scalar_prefetch=0,
            grid=grid,
            in_specs=in_specs,
            out_specs=pl.BlockSpec((tm, tn), lambda i, j, k: (i, j)),
            scratch_shapes=[pltpu.VMEM((tm, tn), jnp.float32)],
        ),
        compiler_params=pltpu.CompilerParams(
            dimension_semantics=("parallel", "parallel", "arbitrary"),
            vmem_limit_bytes=_VMEM_LIMIT,
        ),
    )(*args)

    out = out[:M]
    return out.reshape(N, Ho, Wo, cout)


@jax.jit
def maxpool3x3_s2_p1(x):
    """MaxPool2d(kernel_size=3, stride=2, padding=1) on NHWC, input read once."""
    N, H, W, C = x.shape
    xp = jnp.pad(x, ((0, 0), (1, 1), (1, 1), (0, 0)), constant_values=-jnp.inf)
    Ho = (H + 2 - 3) // 2 + 1
    Wo = (W + 2 - 3) // 2 + 1
    # 2x2 phase decimation: total data == padded input (no 9x expansion).
    p00 = xp[:, 0::2, 0::2, :]
    p01 = xp[:, 0::2, 1::2, :]
    p10 = xp[:, 1::2, 0::2, :]
    p11 = xp[:, 1::2, 1::2, :]

    def spec(p):
        return pl.BlockSpec((1,) + p.shape[1:], lambda n: (n, 0, 0, 0))

    out = pl.pallas_call(
        functools.partial(_maxpool_kernel, Ho=Ho, Wo=Wo),
        out_shape=jax.ShapeDtypeStruct((N, Ho, Wo, C), x.dtype),
        grid=(N,),
        in_specs=[spec(p00), spec(p01), spec(p10), spec(p11)],
        out_specs=pl.BlockSpec((1, Ho, Wo, C), lambda n: (n, 0, 0, 0)),
        compiler_params=pltpu.CompilerParams(
            dimension_semantics=("parallel",),
            vmem_limit_bytes=_VMEM_LIMIT,
        ),
    )(p00, p01, p10, p11)
    return out


@jax.jit
def global_avgpool(x):
    """AdaptiveAvgPool2d((1,1)) on NHWC -> (N, C) float32."""
    N, H, W, C = x.shape
    return pl.pallas_call(
        _avgpool_kernel,
        out_shape=jax.ShapeDtypeStruct((N, C), jnp.float32),
        in_specs=[_VMEM],
        out_specs=_VMEM,
    )(x.reshape(N, H * W, C))


# ----------------------------- ResNet152 parameters (pre-packed) -----------------------------

def _pack_conv(w_ochw, scale, bias):
    """Pack a PyTorch-layout conv weight + folded BN once: (Kp, Cout) bf16, f32 scale/bias."""
    cout, cin, kh, kw = w_ochw.shape
    K = kh * kw * cin
    kp = _round_up(K, 128)
    b = w_ochw.transpose(2, 3, 1, 0).reshape(K, cout)       # (kh, kw, cin) -> K ordering
    if kp > K:
        b = np.pad(b, ((0, kp - K), (0, 0)))
    return {
        "b": jnp.asarray(b, dtype=jnp.bfloat16),
        "scale": jnp.asarray(scale.reshape(1, cout), dtype=jnp.float32),
        "bias": jnp.asarray(bias.reshape(1, cout), dtype=jnp.float32),
        "kh": kh, "kw": kw,
    }


def make_resnet152_params():
    """Deterministic synthetic parameters with exact ResNet152 shapes (BN folded, packed)."""
    rng = np.random.default_rng(0)

    def conv_w(cout, cin, kh, kw):
        fan = cin * kh * kw
        return (rng.standard_normal((cout, cin, kh, kw)) / np.sqrt(fan)).astype(np.float32)

    def bn(c):
        gamma = 1.0 + 0.1 * rng.standard_normal(c)
        beta = 0.1 * rng.standard_normal(c)
        mean = 0.1 * rng.standard_normal(c)
        var = 1.0 + 0.1 * np.abs(rng.standard_normal(c))
        scale = (gamma / np.sqrt(var + _BN_EPS)).astype(np.float32)
        bias = (beta - mean * scale).astype(np.float32)
        return scale, bias

    def cbn(cout, cin, kh, kw):
        s, b = bn(cout)
        return _pack_conv(conv_w(cout, cin, kh, kw), s, b)

    params = {"stem": cbn(64, 3, 7, 7)}

    layers = []
    inplanes = 64
    cfg = [(64, 3, 1), (128, 8, 2), (256, 36, 2), (512, 3, 2)]   # ResNet152: [3, 8, 36, 3]
    for planes, n_blocks, layer_stride in cfg:
        layer = []
        for bidx in range(n_blocks):
            s = layer_stride if bidx == 0 else 1
            blk = {
                "stride": s,
                "conv1": cbn(planes, inplanes, 1, 1),
                "conv2": cbn(planes, planes, 3, 3),
                "conv3": cbn(planes * 4, planes, 1, 1),
            }
            if bidx == 0:   # downsample branch (inplanes != planes*4 or stride != 1)
                blk["ds"] = cbn(planes * 4, inplanes, 1, 1)
                inplanes = planes * 4
            layer.append(blk)
        layers.append(layer)
    params["layers"] = layers
    return params


# ----------------------------- forward -----------------------------

def _conv(x, c, *, stride, pad, relu, residual=None):
    return conv_bn(x, c["b"], c["scale"], c["bias"], residual=residual,
                   kh=c["kh"], kw=c["kw"], stride=stride, pad=pad, relu=relu)


def bottleneck(x, p):
    s = p["stride"]
    out = _conv(x, p["conv1"], stride=1, pad=0, relu=True)
    out = _conv(out, p["conv2"], stride=s, pad=1, relu=True)
    if "ds" in p:
        identity = _conv(x, p["ds"], stride=s, pad=0, relu=False)
    else:
        identity = x
    # conv3 + BN + residual add + ReLU fused in one Pallas matmul epilogue.
    return _conv(out, p["conv3"], stride=1, pad=0, relu=True, residual=identity)


def resnet152_forward(x_nchw, params):
    """x_nchw: (N, 3, H, W) float32.  Returns (N, 2048, 1, 1) float32."""
    x = jnp.transpose(x_nchw, (0, 2, 3, 1)).astype(jnp.bfloat16)   # NCHW -> NHWC, bf16
    x = _conv(x, params["stem"], stride=2, pad=3, relu=True)
    x = maxpool3x3_s2_p1(x)
    for layer in params["layers"]:
        for blk in layer:
            x = bottleneck(x, blk)
    feat = global_avgpool(x)                                       # (N, 2048) f32
    return feat.reshape(feat.shape[0], feat.shape[1], 1, 1)        # NCHW (N, 2048, 1, 1)


# ----------------------------- main -----------------------------

if __name__ == "__main__":
    params = make_resnet152_params()
    key = jax.random.PRNGKey(0)
    # Small input consistent with the module: 3 input channels, spatial 32x32
    # (divisible by the total /32 downsampling of ResNet152).
    x = jax.random.normal(key, (2, 3, 32, 32), dtype=jnp.float32)
    out = resnet152_forward(x, params)
    out = jax.block_until_ready(out)
    assert out.shape == (2, 2048, 1, 1), out.shape
    assert out.dtype == jnp.float32
    assert bool(jnp.all(jnp.isfinite(out)))
    print("KERNEL_OK")
</pallas_src>

<mosaic_0001>
module attributes {stable_mosaic.version = 11 : i64} {
  func.func @_mm_bn_kernel(%arg0: i32, %arg1: i32, %arg2: i32, %arg3: memref<256x256xbf16, #tpu.memory_space<vmem>>, %arg4: memref<256x64xbf16, #tpu.memory_space<vmem>>, %arg5: memref<1x64xf32, #tpu.memory_space<vmem>>, %arg6: memref<1x64xf32, #tpu.memory_space<vmem>>, %arg7: memref<256x64xbf16, #tpu.memory_space<vmem>>, %arg8: memref<256x64xf32, #tpu.memory_space<vmem>>) attributes {dimension_semantics = [#tpu.dimension_semantics<parallel>, #tpu.dimension_semantics<parallel>, #tpu.dimension_semantics<arbitrary>], iteration_bounds = array<i64: 2, 1, 1>, scalar_prefetch = 0 : i64, scratch_operands = 1 : i64, tpu.core_type = #tpu.core_type<tc>, window_params = [{transform_indices = @transform_0, window_bounds = array<i64: 256, 256>}, {transform_indices = @transform_1, window_bounds = array<i64: 256, 64>}, {transform_indices = @transform_2, window_bounds = array<i64: 1, 64>}, {transform_indices = @transform_3, window_bounds = array<i64: 1, 64>}, {transform_indices = @transform_4, window_bounds = array<i64: 256, 64>}]} {
    %c0_i32 = arith.constant 0 : i32
    %0 = arith.cmpi eq, %arg2, %c0_i32 : i32
    %1 = arith.extui %0 : i1 to i32
    %c0_i32_0 = arith.constant 0 : i32
    %2 = arith.cmpi ne, %1, %c0_i32_0 : i32
    scf.if %2 {
      %cst_10 = arith.constant 0.000000e+00 : f32
      %12 = vector.broadcast %cst_10 : f32 to vector<256x64xf32>
      %c0_11 = arith.constant 0 : index
      %c0_12 = arith.constant 0 : index
      %13 = vector.load %arg8[%c0_11, %c0_12] : memref<256x64xf32, #tpu.memory_space<vmem>>, vector<256x64xf32>
      tpu.vector_store %arg8[%c0_11, %c0_12], %12 {strides = array<i32>} : memref<256x64xf32, #tpu.memory_space<vmem>>, vector<256x64xf32>,
    } else {
    }
    %c0 = arith.constant 0 : index
    %c0_1 = arith.constant 0 : index
    %3 = vector.load %arg8[%c0, %c0_1] : memref<256x64xf32, #tpu.memory_space<vmem>>, vector<256x64xf32>
    %c0_2 = arith.constant 0 : index
    %c0_3 = arith.constant 0 : index
    %4 = vector.load %arg3[%c0_2, %c0_3] : memref<256x256xbf16, #tpu.memory_space<vmem>>, vector<256x256xbf16>
    %c0_4 = arith.constant 0 : index
    %c0_5 = arith.constant 0 : index
    %5 = vector.load %arg4[%c0_4, %c0_5] : memref<256x64xbf16, #tpu.memory_space<vmem>>, vector<256x64xbf16>
    %cst = arith.constant dense<0.000000e+00> : vector<256x64xf32>
    %6 = tpu.matmul %4, %5, %cst {dimension_numbers = #tpu.dot_dimension_numbers<[1], [0], [0], [1], [0, 0, 1, 1], [], []>} : vector<256x256xbf16>, vector<256x64xbf16>, vector<256x64xf32> -> vector<256x64xf32>
    %7 = arith.addf %3, %6 : vector<256x64xf32>
    %c0_6 = arith.constant 0 : index
    %c0_7 = arith.constant 0 : index
    %8 = vector.load %arg8[%c0_6, %c0_7] : memref<256x64xf32, #tpu.memory_space<vmem>>, vector<256x64xf32>
    tpu.vector_store %arg8[%c0_6, %c0_7], %7 {strides = array<i32>} : memref<256x64xf32, #tpu.memory_space<vmem>>, vector<256x64xf32>,
    %c0_i32_8 = arith.constant 0 : i32
    %9 = arith.cmpi eq, %arg2, %c0_i32_8 : i32
    %10 = arith.extui %9 : i1 to i32
    %c0_i32_9 = arith.constant 0 : i32
    %11 = arith.cmpi ne, %10, %c0_i32_9 : i32
    scf.if %11 {
      %c0_10 = arith.constant 0 : index
      %c0_11 = arith.constant 0 : index
      %12 = vector.load %arg8[%c0_10, %c0_11] : memref<256x64xf32, #tpu.memory_space<vmem>>, vector<256x64xf32>
      %c0_12 = arith.constant 0 : index
      %c0_13 = arith.constant 0 : index
      %13 = vector.load %arg5[%c0_12, %c0_13] : memref<1x64xf32, #tpu.memory_space<vmem>>, vector<1x64xf32>
      %14 = vector.broadcast %13 : vector<1x64xf32> to vector<256x64xf32>
      %15 = arith.mulf %12, %14 : vector<256x64xf32>
      %c0_14 = arith.constant 0 : index
      %c0_15 = arith.constant 0 : index
      %16 = vector.load %arg6[%c0_14, %c0_15] : memref<1x64xf32, #tpu.memory_space<vmem>>, vector<1x64xf32>
      %17 = vector.broadcast %16 : vector<1x64xf32> to vector<256x64xf32>
      %18 = arith.addf %15, %17 : vector<256x64xf32>
      %cst_16 = arith.constant 0.000000e+00 : f32
      %19 = vector.broadcast %cst_16 : f32 to vector<256x64xf32>
      %20 = arith.maximumf %18, %19 : vector<256x64xf32>
      %21 = arith.truncf %20 : vector<256x64xf32> to vector<256x64xbf16>
      %c0_17 = arith.constant 0 : index
      %c0_18 = arith.constant 0 : index
      %22 = vector.load %arg7[%c0_17, %c0_18] : memref<256x64xbf16, #tpu.memory_space<vmem>>, vector<256x64xbf16>
      tpu.vector_store %arg7[%c0_17, %c0_18], %21 {strides = array<i32>} : memref<256x64xbf16, #tpu.memory_space<vmem>>, vector<256x64xbf16>,
    } else {
    }
    return
  }
  func.func @transform_0(%arg0: i32, %arg1: i32, %arg2: i32) -> (i32, i32) {
    %c0_i32 = arith.constant 0 : i32
    return %arg0, %arg2 : i32, i32
  }
  func.func @transform_1(%arg0: i32, %arg1: i32, %arg2: i32) -> (i32, i32) {
    %c0_i32 = arith.constant 0 : i32
    return %arg2, %arg1 : i32, i32
  }
  func.func @transform_2(%arg0: i32, %arg1: i32, %arg2: i32) -> (i32, i32) {
    %c0_i32 = arith.constant 0 : i32
    %c0_i32_0 = arith.constant 0 : i32
    return %c0_i32, %arg1 : i32, i32
  }
  func.func @transform_3(%arg0: i32, %arg1: i32, %arg2: i32) -> (i32, i32) {
    %c0_i32 = arith.constant 0 : i32
    %c0_i32_0 = arith.constant 0 : i32
    return %c0_i32, %arg1 : i32, i32
  }
  func.func @transform_4(%arg0: i32, %arg1: i32, %arg2: i32) -> (i32, i32) {
    %c0_i32 = arith.constant 0 : i32
    return %arg0, %arg1 : i32, i32
  }
}

</mosaic_0001>

<llo_original>
// kernel: conv_bn.1
$region0: #{conv_bn.1}
  #allocation0 [shape = 'u32[]', space=smem, size = 0x4, offset = 0x4, fixed_abs, tag = 'smem constant byte address 0x4 - core index']
  #allocation1 [shape = 'u32[72,128]{1,0:T(1,128)}', space=vmem, size = 0x9000, scoped, tag = 'internal scratch']
  #allocation2 [shape = 'f32[256,64]{1,0:T(8,128)}', space=vmem, size = 0x20000, scoped, tag = 'scratch operand']
  %s0 = inlined_call_operand.vmem [shape: bf16[512,256], index: 0, kind: input, shape index: {}]
  %s1 = inlined_call_operand.vmem [shape: bf16[256,64], index: 1, kind: input, shape index: {}]
  %s2 = inlined_call_operand.vmem [shape: f32[1,64], index: 2, kind: input, shape index: {}]
  %s3 = inlined_call_operand.vmem [shape: f32[1,64], index: 3, kind: input, shape index: {}]
  %s4 = inlined_call_operand.hbm [shape: bf16[512,64], index: 4, kind: output, shape index: {}]
  %s5 = sld [smem:[#allocation0]]
  $region57: #{conv_bn.1} parent=0
    _
  %s7 = ssub.s32 1, %s5
  %s8 = scalar_select 0, %s7, %s5
  $region1: #{conv_bn.1} parent=0
    #allocation3 [shape = 'u8[131072]{0}', space=vmem, size = 0x20000, scoped, tag = 'output window, operand 0']
    #allocation4 [shape = 's32[2]{0}', space=sflag, size = 0x8, scoped, tag = 'scoped memory for conv_bn.1']
    %9 = vsyncpa [#allocation4], 0
    %s10 = scalar_lea.sflag [#allocation4], 1
    %11 = vsyncpa %s10, 0
    loop: start=0, step=1, limit=4
    $region2: #{conv_bn.1} parent=1 // loop_pre_header
      _
    $region3: #{conv_bn.1} parent=1 // loop_header
      %s13 = sphi 0, %s17
      %p14 = scmp.ge.s32.totalorder %s13, 4
      %s20 = sphi 0, %s39
      %s21 = sphi 0, %s35
      %s22 = sphi 0, %s31
      %s23 = sphi 0, %s20
      %s24 = sphi 0, %s21
      %s25 = sphi 0, %s22
      %s26 = sphi 0, %s23
      %s27 = sphi 0, %s24
      %s28 = sphi 0, %s25
      %s44 = sphi 0, %s46
      %s47 = sphi 0, %s44
      %s48 = sphi 0, %s47
      %s64 = sphi 0, %s48
      %s72 = sphi 0, %s74
      %s75 = sphi 0, %s72
      %s76 = sphi 0, %s75
      %s92 = sphi 0, %s76
      %s98 = sphi 0, %s100
      %s101 = sphi 0, %s98
      %s102 = sphi 0, %s101
      %s118 = sphi 0, %s102
      %s124 = sphi 0, %s126
      %s127 = sphi 0, %s124
      %s128 = sphi 0, %s127
      %s144 = sphi 0, %s128
      %s152 = sphi 0, %s154
      %s155 = sphi 0, %s152
      %s156 = sphi 0, %s155
      %s172 = sphi 0, %s156
    $region4: #{conv_bn.1} parent=1 // loop_header_branch
      %16 = sbr.rel (%p14) target = $region8
    $region5: #{conv_bn.1} parent=1 // loop_body
      %s18 = ssub.s32 %s13, 1
      %s19 = ssub.s32 %s13, 2
      %s29 = sadd.s32 1, %s22
      %p30 = scmp.ge.s32.totalorder %s29, 1
      %s31 = scalar_select %p30, 0, %s29
      %s32 = sadd.s32 1, %s21
      %s33 = scalar_select %p30, %s32, %s21
      %p34 = scmp.ge.s32.totalorder %s33, 1
      %s35 = scalar_select %p34, 0, %s33
      %s36 = sadd.s32 1, %s20
      %s37 = scalar_select %p34, %s36, %s20
      %p38 = scmp.ge.s32.totalorder %s37, 2
      %s39 = scalar_select %p38, 0, %s37
      %s40 = ssub.s32 %s20, %s39
      %s41 = ssub.s32 %s22, %s31
      %s42 = sor.u32 %s40, %s41
      %p43 = scmp.eq.s32.totalorder %s42, 0
      %s45 = sadd.s32 %s44, 1
      %s46 = scalar_select %p43, %s44, %s45
      %p49 = pneg %p43
      %p50 = scmp.eq.s32.totalorder %s13, 1
      %p51 = por %p49, %p50
      %p52 = scmp.ne.s32.totalorder %s44, %s47
      %p53 = scmp.eq.s32.totalorder %s13, 0
      %p54 = por %p52, %p53
      %p55 = scmp.ne.s32.totalorder %s44, %s47
      %p56 = scmp.eq.s32.totalorder %s18, 1
      %p57 = por %p55, %p56
      %p58 = scmp.ne.s32.totalorder %s47, %s48
      %p59 = scmp.eq.s32.totalorder %s18, 0
      %p60 = por %p58, %p59
      %p61 = scmp.ne.s32.totalorder %s47, %s48
      %p62 = scmp.eq.s32.totalorder %s19, 1
      %p63 = por %p61, %p62
      %p65 = scmp.ne.s32.totalorder %s48, %s64
      %p66 = scmp.eq.s32.totalorder %s19, 0
      %p67 = por %p65, %p66
      %s68 = ssub.s32 %s22, %s31
      %s69 = ssub.s32 %s21, %s35
      %s70 = sor.u32 %s68, %s69
      %p71 = scmp.eq.s32.totalorder %s70, 0
      %s73 = sadd.s32 %s72, 1
      %s74 = scalar_select %p71, %s72, %s73
      %p77 = pneg %p71
      %p78 = scmp.eq.s32.totalorder %s13, 1
      %p79 = por %p77, %p78
      %p80 = scmp.ne.s32.totalorder %s72, %s75
      %p81 = scmp.eq.s32.totalorder %s13, 0
      %p82 = por %p80, %p81
      %p83 = scmp.ne.s32.totalorder %s72, %s75
      %p84 = scmp.eq.s32.totalorder %s18, 1
      %p85 = por %p83, %p84
      %p86 = scmp.ne.s32.totalorder %s75, %s76
      %p87 = scmp.eq.s32.totalorder %s18, 0
      %p88 = por %p86, %p87
      %p89 = scmp.ne.s32.totalorder %s75, %s76
      %p90 = scmp.eq.s32.totalorder %s19, 1
      %p91 = por %p89, %p90
      %p93 = scmp.ne.s32.totalorder %s76, %s92
      %p94 = scmp.eq.s32.totalorder %s19, 0
      %p95 = por %p93, %p94
      %s96 = ssub.s32 %s21, %s35
      %p97 = scmp.eq.s32.totalorder %s96, 0
      %s99 = sadd.s32 %s98, 1
      %s100 = scalar_select %p97, %s98, %s99
      %p103 = pneg %p97
      %p104 = scmp.eq.s32.totalorder %s13, 1
      %p105 = por %p103, %p104
      %p106 = scmp.ne.s32.totalorder %s98, %s101
      %p107 = scmp.eq.s32.totalorder %s13, 0
      %p108 = por %p106, %p107
      %p109 = scmp.ne.s32.totalorder %s98, %s101
      %p110 = scmp.eq.s32.totalorder %s18, 1
      %p111 = por %p109, %p110
      %p112 = scmp.ne.s32.totalorder %s101, %s102
      %p113 = scmp.eq.s32.totalorder %s18, 0
      %p114 = por %p112, %p113
      %p115 = scmp.ne.s32.totalorder %s101, %s102
      %p116 = scmp.eq.s32.totalorder %s19, 1
      %p117 = por %p115, %p116
      %p119 = scmp.ne.s32.totalorder %s102, %s118
      %p120 = scmp.eq.s32.totalorder %s19, 0
      %p121 = por %p119, %p120
      %s122 = ssub.s32 %s21, %s35
      %p123 = scmp.eq.s32.totalorder %s122, 0
      %s125 = sadd.s32 %s124, 1
      %s126 = scalar_select %p123, %s124, %s125
      %p129 = pneg %p123
      %p130 = scmp.eq.s32.totalorder %s13, 1
      %p131 = por %p129, %p130
      %p132 = scmp.ne.s32.totalorder %s124, %s127
      %p133 = scmp.eq.s32.totalorder %s13, 0
      %p134 = por %p132, %p133
      %p135 = scmp.ne.s32.totalorder %s124, %s127
      %p136 = scmp.eq.s32.totalorder %s18, 1
      %p137 = por %p135, %p136
      %p138 = scmp.ne.s32.totalorder %s127, %s128
      %p139 = scmp.eq.s32.totalorder %s18, 0
      %p140 = por %p138, %p139
      %p141 = scmp.ne.s32.totalorder %s127, %s128
      %p142 = scmp.eq.s32.totalorder %s19, 1
      %p143 = por %p141, %p142
      %p145 = scmp.ne.s32.totalorder %s128, %s144
      %p146 = scmp.eq.s32.totalorder %s19, 0
      %p147 = por %p145, %p146
      %s148 = ssub.s32 %s20, %s39
      %s149 = ssub.s32 %s21, %s35
      %s150 = sor.u32 %s148, %s149
      %p151 = scmp.eq.s32.totalorder %s150, 0
      %s153 = sadd.s32 %s152, 1
      %s154 = scalar_select %p151, %s152, %s153
      %p157 = pneg %p151
      %p158 = scmp.eq.s32.totalorder %s13, 1
      %p159 = por %p157, %p158
      %p160 = scmp.ne.s32.totalorder %s152, %s155
      %p161 = scmp.eq.s32.totalorder %s13, 0
      %p162 = por %p160, %p161
      %p163 = scmp.ne.s32.totalorder %s152, %s155
      %p164 = scmp.eq.s32.totalorder %s18, 1
      %p165 = por %p163, %p164
      %p166 = scmp.ne.s32.totalorder %s155, %s156
      %p167 = scmp.eq.s32.totalorder %s18, 0
      %p168 = por %p166, %p167
      %p169 = scmp.ne.s32.totalorder %s155, %s156
      %p170 = scmp.eq.s32.totalorder %s19, 1
      %p171 = por %p169, %p170
      %p173 = scmp.ne.s32.totalorder %s156, %s172
      %p174 = scmp.eq.s32.totalorder %s19, 0
      %p175 = por %p173, %p174
      %p176 = scmp.le.s32.totalorder 1, %s13
      %p177 = scmp.lt.s32.totalorder %s13, 3
      %p178 = pnand %p176, %p177
      %p179 = pneg %p178
      // Predicated region
      $region9: #{conv_bn.1} parent=5 // pred_check
        _
      $region10: #{conv_bn.1} parent=5 // pred_check_branch
        %181 = sbr.rel (%p178) target = $region12
      $region11: #{conv_bn.1} parent=5 // pred_region
        %s182 = ssub.s32 %s13, 1
        // Predicated region
        $region13: #{conv_bn.1} parent=11 // pred_check
          %p183 = pneg %p88
        $region14: #{conv_bn.1} parent=11 // pred_check_branch
          %185 = sbr.rel (%p183) target = $region16
        $region15: #{conv_bn.1} parent=11 // pred_region
          %s186 = smul.u32 32, %s25
          %p187 = scmp.lt.s32.totalorder %s186, 31
          %s188 = scalar_select %p187, %s186, 31
          %p189 = scmp.lt.s32.totalorder %s24, 0
          %s190 = scalar_select %p189, %s24, 0
          %s191 = sadd.s32 %s190, %s188
          %s192 = smul.addr %s191, 4
          %s193 = scalar_lea.vmem %s1, %s192
          %s194 = smul.u32 32, %s25
        $region16: #{conv_bn.1} parent=11 // pred_fallthru
          _
        // Predicated region
        $region17: #{conv_bn.1} parent=11 // pred_check
          %p195 = pneg %p114
        $region18: #{conv_bn.1} parent=11 // pred_check_branch
          %197 = sbr.rel (%p195) target = $region20
        $region19: #{conv_bn.1} parent=11 // pred_region
          %p198 = scmp.lt.s32.totalorder %s24, 0
          %s199 = scalar_select %p198, %s24, 0
          %s200 = scalar_lea.vmem %s2, %s199
        $region20: #{conv_bn.1} parent=11 // pred_fallthru
          _
        // Predicated region
        $region21: #{conv_bn.1} parent=11 // pred_check
          %p201 = pneg %p140
        $region22: #{conv_bn.1} parent=11 // pred_check_branch
          %203 = sbr.rel (%p201) target = $region24
        $region23: #{conv_bn.1} parent=11 // pred_region
          %p204 = scmp.lt.s32.totalorder %s24, 0
          %s205 = scalar_select %p204, %s24, 0
          %s206 = scalar_lea.vmem %s3, %s205
        $region24: #{conv_bn.1} parent=11 // pred_fallthru
          _
      $region12: #{conv_bn.1} parent=5 // pred_fallthru
        _
      %p207 = scmp.lt.s32.totalorder %s13, 2
      // Predicated region
      $region25: #{conv_bn.1} parent=5 // pred_check
        %p208 = pneg %p207
      $region26: #{conv_bn.1} parent=5 // pred_check_branch
        %210 = sbr.rel (%p208) target = $region28
      $region27: #{conv_bn.1} parent=5 // pred_region
        // Predicated region
        $region29: #{conv_bn.1} parent=27 // pred_check
          %p211 = pneg %p54
        $region30: #{conv_bn.1} parent=27 // pred_check_branch
          %213 = sbr.rel (%p211) target = $region32
        $region31: #{conv_bn.1} parent=27 // pred_region
          %s214 = smul.u32 32, %s20
          %s215 = smul.u32 2, %s22
          %p216 = scmp.lt.s32.totalorder %s214, 63
          %s217 = scalar_select %p216, %s214, 63
          %p218 = scmp.lt.s32.totalorder %s215, 1
          %s219 = scalar_select %p218, %s215, 1
          %s220 = smul.addr %s217, 2
          %s221 = sadd.s32 %s219, %s220
          %s222 = smul.addr %s221, 4
          %s223 = scalar_lea.vmem %s0, %s222
          %s224 = smul.u32 32, %s20
          %s225 = smul.u32 2, %s22
        $region32: #{conv_bn.1} parent=27 // pred_fallthru
          _
      $region28: #{conv_bn.1} parent=5 // pred_fallthru
        _
      %p226 = scmp.le.s32.totalorder 1, %s13
      %p227 = scmp.lt.s32.totalorder %s13, 3
      %p228 = pnand %p226, %p227
      %p229 = pneg %p228
      // Predicated region
      $region33: #{conv_bn.1} parent=5 // pred_check
        _
      $region34: #{conv_bn.1} parent=5 // pred_check_branch
        %231 = sbr.rel (%p228) target = $region36
      $region35: #{conv_bn.1} parent=5 // pred_region
        %s232 = ssub.s32 %s13, 1
        %s233 = smul.u32 32, %s23
        %s234 = smul.u32 2, %s25
        %p235 = scmp.lt.s32.totalorder %s233, 63
        %s236 = scalar_select %p235, %s233, 63
        %p237 = scmp.lt.s32.totalorder %s234, 1
        %s238 = scalar_select %p237, %s234, 1
        %s239 = smul.addr %s236, 2
        %s240 = sadd.s32 %s238, %s239
        %s241 = smul.addr %s240, 4
        %s242 = scalar_lea.vmem %s0, %s241
        %p243 = pneg %p60
        %p244 = pneg %p57
        %s245 = smul.u32 32, %s25
        %p246 = scmp.lt.s32.totalorder %s245, 31
        %s247 = scalar_select %p246, %s245, 31
        %p248 = scmp.lt.s32.totalorder %s24, 0
        %s249 = scalar_select %p248, %s24, 0
        %s250 = sadd.s32 %s249, %s247
        %s251 = smul.addr %s250, 4
        %s252 = scalar_lea.vmem %s1, %s251
        %p253 = pneg %p88
        %p254 = pneg %p85
        %p255 = scmp.lt.s32.totalorder %s24, 0
        %s256 = scalar_select %p255, %s24, 0
        %s257 = scalar_lea.vmem %s2, %s256
        %p258 = pneg %p114
        %p259 = pneg %p111
        %p260 = scmp.lt.s32.totalorder %s24, 0
        %s261 = scalar_select %p260, %s24, 0
        %s262 = scalar_lea.vmem %s3, %s261
        %p263 = pneg %p140
        %p264 = pneg %p137
        %p265 = pneg %p168
        %p266 = pneg %p165
        %s267 = sand.u32 %s155, 1
        %s268 = scalar_lea.sflag [#allocation4], %s267
        %s269 = sand.u32 %s155, 1
        %s270 = smul.addr %s269, 128
        %s271 = scalar_lea.vmem [#allocation3], %s270
        %s272 = smul.u32 32, %s23
        %s273 = smul.u32 2, %s25
        %p274 = scmp.lt.s32.totalorder %s272, 63
        %s275 = scalar_select %p274, %s272, 63
        %p276 = scmp.lt.s32.totalorder %s273, 1
        %s277 = scalar_select %p276, %s273, 1
        %s278 = smul.addr %s275, 2
        %s279 = sadd.s32 %s277, %s278
        %s280 = smul.addr %s279, 4
        %s281 = scalar_lea.vmem %s0, %s280
        %s282 = smul.u32 32, %s23
        %s283 = smul.u32 2, %s25
        %s284 = smul.u32 32, %s25
        %p285 = scmp.lt.s32.totalorder %s284, 31
        %s286 = scalar_select %p285, %s284, 31
        %p287 = scmp.lt.s32.totalorder %s24, 0
        %s288 = scalar_select %p287, %s24, 0
        %s289 = sadd.s32 %s288, %s286
        %s290 = smul.addr %s289, 4
        %s291 = scalar_lea.vmem %s1, %s290
        %s292 = smul.u32 32, %s25
        %p293 = scmp.lt.s32.totalorder %s24, 0
        %s294 = scalar_select %p293, %s24, 0
        %s295 = scalar_lea.vmem %s2, %s294
        %p296 = scmp.lt.s32.totalorder %s24, 0
        %s297 = scalar_select %p296, %s24, 0
        %s298 = scalar_lea.vmem %s3, %s297
        %s299 = smul.u32 32, %s23
        %p300 = scmp.eq.s32.totalorder %s25, 0
        // Predicated region
        $region37: #{conv_bn.1} parent=35 // pred_check
          %p301 = pneg %p300
        $region38: #{conv_bn.1} parent=35 // pred_check_branch
          %303 = sbr.rel (%p301) target = $region40
        $region39: #{conv_bn.1} parent=35 // pred_region
          %vm304 = vcmask 523264
          %305 = vst.msk [vmem:[#allocation2] sm:$0xff] %vm304, 0.0
          %306 = vst.msk [vmem:[#allocation2 + $0x8] sm:$0xff] %vm304, 0.0
          %307 = vst.msk [vmem:[#allocation2 + $0x10] sm:$0xff] %vm304, 0.0
          %308 = vst.msk [vmem:[#allocation2 + $0x18] sm:$0xff] %vm304, 0.0
          %309 = vst.msk [vmem:[#allocation2 + $0x20] sm:$0xff] %vm304, 0.0
          %310 = vst.msk [vmem:[#allocation2 + $0x28] sm:$0xff] %vm304, 0.0
          %311 = vst.msk [vmem:[#allocation2 + $0x30] sm:$0xff] %vm304, 0.0
          %312 = vst.msk [vmem:[#allocation2 + $0x38] sm:$0xff] %vm304, 0.0
          %313 = vst.msk [vmem:[#allocation2 + $0x40] sm:$0xff] %vm304, 0.0
          %314 = vst.msk [vmem:[#allocation2 + $0x48] sm:$0xff] %vm304, 0.0
          %315 = vst.msk [vmem:[#allocation2 + $0x50] sm:$0xff] %vm304, 0.0
          %316 = vst.msk [vmem:[#allocation2 + $0x58] sm:$0xff] %vm304, 0.0
          %317 = vst.msk [vmem:[#allocation2 + $0x60] sm:$0xff] %vm304, 0.0
          %318 = vst.msk [vmem:[#allocation2 + $0x68] sm:$0xff] %vm304, 0.0
          %319 = vst.msk [vmem:[#allocation2 + $0x70] sm:$0xff] %vm304, 0.0
          %320 = vst.msk [vmem:[#allocation2 + $0x78] sm:$0xff] %vm304, 0.0
          %321 = vst.msk [vmem:[#allocation2 + $0x80] sm:$0xff] %vm304, 0.0
          %322 = vst.msk [vmem:[#allocation2 + $0x88] sm:$0xff] %vm304, 0.0
          %323 = vst.msk [vmem:[#allocation2 + $0x90] sm:$0xff] %vm304, 0.0
          %324 = vst.msk [vmem:[#allocation2 + $0x98] sm:$0xff] %vm304, 0.0
          %325 = vst.msk [vmem:[#allocation2 + $0xa0] sm:$0xff] %vm304, 0.0
          %326 = vst.msk [vmem:[#allocation2 + $0xa8] sm:$0xff] %vm304, 0.0
          %327 = vst.msk [vmem:[#allocation2 + $0xb0] sm:$0xff] %vm304, 0.0
          %328 = vst.msk [vmem:[#allocation2 + $0xb8] sm:$0xff] %vm304, 0.0
          %329 = vst.msk [vmem:[#allocation2 + $0xc0] sm:$0xff] %vm304, 0.0
          %330 = vst.msk [vmem:[#allocation2 + $0xc8] sm:$0xff] %vm304, 0.0
          %331 = vst.msk [vmem:[#allocation2 + $0xd0] sm:$0xff] %vm304, 0.0
          %332 = vst.msk [vmem:[#allocation2 + $0xd8] sm:$0xff] %vm304, 0.0
          %333 = vst.msk [vmem:[#allocation2 + $0xe0] sm:$0xff] %vm304, 0.0
          %334 = vst.msk [vmem:[#allocation2 + $0xe8] sm:$0xff] %vm304, 0.0
          %335 = vst.msk [vmem:[#allocation2 + $0xf0] sm:$0xff] %vm304, 0.0
          %336 = vst.msk [vmem:[#allocation2 + $0xf8] sm:$0xff] %vm304, 0.0
        $region40: #{conv_bn.1} parent=35 // pred_fallthru
          _
        %v337 = vld [vmem:[#allocation2] sm:$0xff]
        %v338 = vld [vmem:[#allocation2 + $0x8] sm:$0xff]
        %v339 = vld [vmem:[#allocation2 + $0x10] sm:$0xff]
        %v340 = vld [vmem:[#allocation2 + $0x18] sm:$0xff]
        %v341 = vld [vmem:[#allocation2 + $0x20] sm:$0xff]
        %v342 = vld [vmem:[#allocation2 + $0x28] sm:$0xff]
        %v343 = vld [vmem:[#allocation2 + $0x30] sm:$0xff]
        %v344 = vld [vmem:[#allocation2 + $0x38] sm:$0xff]
        %v345 = vld [vmem:[#allocation2 + $0x40] sm:$0xff]
        %v346 = vld [vmem:[#allocation2 + $0x48] sm:$0xff]
        %v347 = vld [vmem:[#allocation2 + $0x50] sm:$0xff]
        %v348 = vld [vmem:[#allocation2 + $0x58] sm:$0xff]
        %v349 = vld [vmem:[#allocation2 + $0x60] sm:$0xff]
        %v350 = vld [vmem:[#allocation2 + $0x68] sm:$0xff]
        %v351 = vld [vmem:[#allocation2 + $0x70] sm:$0xff]
        %v352 = vld [vmem:[#allocation2 + $0x78] sm:$0xff]
        %v353 = vld [vmem:[#allocation2 + $0x80] sm:$0xff]
        %v354 = vld [vmem:[#allocation2 + $0x88] sm:$0xff]
        %v355 = vld [vmem:[#allocation2 + $0x90] sm:$0xff]
        %v356 = vld [vmem:[#allocation2 + $0x98] sm:$0xff]
        %v357 = vld [vmem:[#allocation2 + $0xa0] sm:$0xff]
        %v358 = vld [vmem:[#allocation2 + $0xa8] sm:$0xff]
        %v359 = vld [vmem:[#allocation2 + $0xb0] sm:$0xff]
        %v360 = vld [vmem:[#allocation2 + $0xb8] sm:$0xff]
        %v361 = vld [vmem:[#allocation2 + $0xc0] sm:$0xff]
        %v362 = vld [vmem:[#allocation2 + $0xc8] sm:$0xff]
        %v363 = vld [vmem:[#allocation2 + $0xd0] sm:$0xff]
        %v364 = vld [vmem:[#allocation2 + $0xd8] sm:$0xff]
        %v365 = vld [vmem:[#allocation2 + $0xe0] sm:$0xff]
        %v366 = vld [vmem:[#allocation2 + $0xe8] sm:$0xff]
        %v367 = vld [vmem:[#allocation2 + $0xf0] sm:$0xff]
        %v368 = vld [vmem:[#allocation2 + $0xf8] sm:$0xff]
        %v369 = vld [vmem:[%s281] sm:$0xff]
        %v370 = vld [vmem:[%s281 + $0x8] sm:$0xff]
        %v371 = vld [vmem:[%s281 + $0x10] sm:$0xff]
        %v372 = vld [vmem:[%s281 + $0x18] sm:$0xff]
        %v373 = vld [vmem:[%s281 + $0x20] sm:$0xff]
        %v374 = vld [vmem:[%s281 + $0x28] sm:$0xff]
        %v375 = vld [vmem:[%s281 + $0x30] sm:$0xff]
        %v376 = vld [vmem:[%s281 + $0x38] sm:$0xff]
        %v377 = vld [vmem:[%s281 + $0x40] sm:$0xff]
        %v378 = vld [vmem:[%s281 + $0x48] sm:$0xff]
        %v379 = vld [vmem:[%s281 + $0x50] sm:$0xff]
        %v380 = vld [vmem:[%s281 + $0x58] sm:$0xff]
        %v381 = vld [vmem:[%s281 + $0x60] sm:$0xff]
        %v382 = vld [vmem:[%s281 + $0x68] sm:$0xff]
        %v383 = vld [vmem:[%s281 + $0x70] sm:$0xff]
        %v384 = vld [vmem:[%s281 + $0x78] sm:$0xff]
        %v385 = vld [vmem:[%s281 + $0x80] sm:$0xff]
        %v386 = vld [vmem:[%s281 + $0x88] sm:$0xff]
        %v387 = vld [vmem:[%s281 + $0x90] sm:$0xff]
        %v388 = vld [vmem:[%s281 + $0x98] sm:$0xff]
        %v389 = vld [vmem:[%s281 + $0xa0] sm:$0xff]
        %v390 = vld [vmem:[%s281 + $0xa8] sm:$0xff]
        %v391 = vld [vmem:[%s281 + $0xb0] sm:$0xff]
        %v392 = vld [vmem:[%s281 + $0xb8] sm:$0xff]
        %v393 = vld [vmem:[%s281 + $0xc0] sm:$0xff]
        %v394 = vld [vmem:[%s281 + $0xc8] sm:$0xff]
        %v395 = vld [vmem:[%s281 + $0xd0] sm:$0xff]
        %v396 = vld [vmem:[%s281 + $0xd8] sm:$0xff]
        %v397 = vld [vmem:[%s281 + $0xe0] sm:$0xff]
        %v398 = vld [vmem:[%s281 + $0xe8] sm:$0xff]
        %v399 = vld [vmem:[%s281 + $0xf0] sm:$0xff]
        %v400 = vld [vmem:[%s281 + $0xf8] sm:$0xff]
        %v401 = vld [vmem:[%s291] sm:$0xf]
        %v402 = vld [vmem:[%s291 + $0x4] sm:$0xf]
        %v403 = vld [vmem:[%s291 + $0x8] sm:$0xf]
        %v404 = vld [vmem:[%s291 + $0xc] sm:$0xf]
        %v405 = vld [vmem:[%s291 + $0x10] sm:$0xf]
        %v406 = vld [vmem:[%s291 + $0x14] sm:$0xf]
        %v407 = vld [vmem:[%s291 + $0x18] sm:$0xf]
        %v408 = vld [vmem:[%s291 + $0x1c] sm:$0xf]
        %v409 = vld [vmem:[%s291 + $0x20] sm:$0xf]
        %v410 = vld [vmem:[%s291 + $0x24] sm:$0xf]
        %v411 = vld [vmem:[%s291 + $0x28] sm:$0xf]
        %v412 = vld [vmem:[%s291 + $0x2c] sm:$0xf]
        %v413 = vld [vmem:[%s291 + $0x30] sm:$0xf]
        %v414 = vld [vmem:[%s291 + $0x34] sm:$0xf]
        %v415 = vld [vmem:[%s291 + $0x38] sm:$0xf]
        %v416 = vld [vmem:[%s291 + $0x3c] sm:$0xf]
        %v417 = vld [vmem:[%s291 + $0x40] sm:$0xf]
        %v418 = vld [vmem:[%s291 + $0x44] sm:$0xf]
        %v419 = vld [vmem:[%s291 + $0x48] sm:$0xf]
        %v420 = vld [vmem:[%s291 + $0x4c] sm:$0xf]
        %v421 = vld [vmem:[%s291 + $0x50] sm:$0xf]
        %v422 = vld [vmem:[%s291 + $0x54] sm:$0xf]
        %v423 = vld [vmem:[%s291 + $0x58] sm:$0xf]
        %v424 = vld [vmem:[%s291 + $0x5c] sm:$0xf]
        %v425 = vld [vmem:[%s291 + $0x60] sm:$0xf]
        %v426 = vld [vmem:[%s291 + $0x64] sm:$0xf]
        %v427 = vld [vmem:[%s291 + $0x68] sm:$0xf]
        %v428 = vld [vmem:[%s291 + $0x6c] sm:$0xf]
        %v429 = vld [vmem:[%s291 + $0x70] sm:$0xf]
        %v430 = vld [vmem:[%s291 + $0x74] sm:$0xf]
        %v431 = vld [vmem:[%s291 + $0x78] sm:$0xf]
        %v432 = vld [vmem:[%s291 + $0x7c] sm:$0xf]
        %v465 = vunpack.c.l.b16 %v369
        %v466 = vunpack.c.h.b16 %v369
        %v467 = vunpack.c.l.b16 %v370
        %v468 = vunpack.c.h.b16 %v370
        %v469 = vunpack.c.l.b16 %v371
        %v470 = vunpack.c.h.b16 %v371
        %v471 = vunpack.c.l.b16 %v372
        %v472 = vunpack.c.h.b16 %v372
        %v473 = vunpack.c.l.b16 %v373
        %v474 = vunpack.c.h.b16 %v373
        %v475 = vunpack.c.l.b16 %v374
        %v476 = vunpack.c.h.b16 %v374
        %v477 = vunpack.c.l.b16 %v375
        %v478 = vunpack.c.h.b16 %v375
        %v479 = vunpack.c.l.b16 %v376
        %v480 = vunpack.c.h.b16 %v376
        %v481 = vunpack.c.l.b16 %v377
        %v482 = vunpack.c.h.b16 %v377
        %v483 = vunpack.c.l.b16 %v378
        %v484 = vunpack.c.h.b16 %v378
        %v485 = vunpack.c.l.b16 %v379
        %v486 = vunpack.c.h.b16 %v379
        %v487 = vunpack.c.l.b16 %v380
        %v488 = vunpack.c.h.b16 %v380
        %v489 = vunpack.c.l.b16 %v381
        %v490 = vunpack.c.h.b16 %v381
        %v491 = vunpack.c.l.b16 %v382
        %v492 = vunpack.c.h.b16 %v382
        %v493 = vunpack.c.l.b16 %v383
        %v494 = vunpack.c.h.b16 %v383
        %v495 = vunpack.c.l.b16 %v384
        %v496 = vunpack.c.h.b16 %v384
        %v497 = vunpack.c.l.b16 %v385
        %v498 = vunpack.c.h.b16 %v385
        %v499 = vunpack.c.l.b16 %v386
        %v500 = vunpack.c.h.b16 %v386
        %v501 = vunpack.c.l.b16 %v387
        %v502 = vunpack.c.h.b16 %v387
        %v503 = vunpack.c.l.b16 %v388
        %v504 = vunpack.c.h.b16 %v388
        %v505 = vunpack.c.l.b16 %v389
        %v506 = vunpack.c.h.b16 %v389
        %v507 = vunpack.c.l.b16 %v390
        %v508 = vunpack.c.h.b16 %v390
        %v509 = vunpack.c.l.b16 %v391
        %v510 = vunpack.c.h.b16 %v391
        %v511 = vunpack.c.l.b16 %v392
        %v512 = vunpack.c.h.b16 %v392
        %v513 = vunpack.c.l.b16 %v393
        %v514 = vunpack.c.h.b16 %v393
        %v515 = vunpack.c.l.b16 %v394
        %v516 = vunpack.c.h.b16 %v394
        %v517 = vunpack.c.l.b16 %v395
        %v518 = vunpack.c.h.b16 %v395
        %v519 = vunpack.c.l.b16 %v396
        %v520 = vunpack.c.h.b16 %v396
        %v521 = vunpack.c.l.b16 %v397
        %v522 = vunpack.c.h.b16 %v397
        %v523 = vunpack.c.l.b16 %v398
        %v524 = vunpack.c.h.b16 %v398
        %v525 = vunpack.c.l.b16 %v399
        %v526 = vunpack.c.h.b16 %v399
        %v527 = vunpack.c.l.b16 %v400
        %v528 = vunpack.c.h.b16 %v400
        %v529 = vpack.c.b16 %v467, %v465
        %v530 = vpack.c.b16 %v468, %v466
        %v531 = vpack.c.b16 %v471, %v469
        %v532 = vpack.c.b16 %v472, %v470
        %v533 = vpack.c.b16 %v475, %v473
        %v534 = vpack.c.b16 %v476, %v474
        %v535 = vpack.c.b16 %v479, %v477
        %v536 = vpack.c.b16 %v480, %v478
        %v537 = vpack.c.b16 %v483, %v481
        %v538 = vpack.c.b16 %v484, %v482
        %v539 = vpack.c.b16 %v487, %v485
        %v540 = vpack.c.b16 %v488, %v486
        %v541 = vpack.c.b16 %v491, %v489
        %v542 = vpack.c.b16 %v492, %v490
        %v543 = vpack.c.b16 %v495, %v493
        %v544 = vpack.c.b16 %v496, %v494
        %v545 = vpack.c.b16 %v499, %v497
        %v546 = vpack.c.b16 %v500, %v498
        %v547 = vpack.c.b16 %v503, %v501
        %v548 = vpack.c.b16 %v504, %v502
        %v549 = vpack.c.b16 %v507, %v505
        %v550 = vpack.c.b16 %v508, %v506
        %v551 = vpack.c.b16 %v511, %v509
        %v552 = vpack.c.b16 %v512, %v510
        %v553 = vpack.c.b16 %v515, %v513
        %v554 = vpack.c.b16 %v516, %v514
        %v555 = vpack.c.b16 %v519, %v517
        %v556 = vpack.c.b16 %v520, %v518
        %v557 = vpack.c.b16 %v523, %v521
        %v558 = vpack.c.b16 %v524, %v522
        %v559 = vpack.c.b16 %v527, %v525
        %v560 = vpack.c.b16 %v528, %v526
        %v625 = vunpack.c.l.b16 %v401
        %v626 = vunpack.c.l.b16 %v402
        %v627 = vunpack.c.l.b16 %v403
        %v628 = vunpack.c.l.b16 %v404
        %v629 = vunpack.c.l.b16 %v405
        %v630 = vunpack.c.l.b16 %v406
        %v631 = vunpack.c.l.b16 %v407
        %v632 = vunpack.c.l.b16 %v408
        %v633 = vunpack.c.l.b16 %v409
        %v634 = vunpack.c.l.b16 %v410
        %v635 = vunpack.c.l.b16 %v411
        %v636 = vunpack.c.l.b16 %v412
        %v637 = vunpack.c.l.b16 %v413
        %v638 = vunpack.c.l.b16 %v414
        %v639 = vunpack.c.l.b16 %v415
        %v640 = vunpack.c.l.b16 %v416
        %v641 = vunpack.c.l.b16 %v417
        %v642 = vunpack.c.l.b16 %v418
        %v643 = vunpack.c.l.b16 %v419
        %v644 = vunpack.c.l.b16 %v420
        %v645 = vunpack.c.l.b16 %v421
        %v646 = vunpack.c.l.b16 %v422
        %v647 = vunpack.c.l.b16 %v423
        %v648 = vunpack.c.l.b16 %v424
        %v649 = vunpack.c.l.b16 %v425
        %v650 = vunpack.c.l.b16 %v426
        %v651 = vunpack.c.l.b16 %v427
        %v652 = vunpack.c.l.b16 %v428
        %v653 = vunpack.c.l.b16 %v429
        %v654 = vunpack.c.l.b16 %v430
        %v655 = vunpack.c.l.b16 %v431
        %v656 = vunpack.c.l.b16 %v432
        %v657 = vpack.c.b16 %v626, %v625
        %v658 = vpack.c.b16 %v628, %v627
        %v659 = vpack.c.b16 %v630, %v629
        %v660 = vpack.c.b16 %v632, %v631
        %v661 = vpack.c.b16 %v634, %v633
        %v662 = vpack.c.b16 %v636, %v635
        %v663 = vpack.c.b16 %v638, %v637
        %v664 = vpack.c.b16 %v640, %v639
        %v665 = vpack.c.b16 %v642, %v641
        %v666 = vpack.c.b16 %v644, %v643
        %v667 = vpack.c.b16 %v646, %v645
        %v668 = vpack.c.b16 %v648, %v647
        %v669 = vpack.c.b16 %v650, %v649
        %v670 = vpack.c.b16 %v652, %v651
        %v671 = vpack.c.b16 %v654, %v653
        %v672 = vpack.c.b16 %v656, %v655
        %689 = vmatpush.bf16.msra.mxu0 %v664
        %690 = vmatpush.bf16.msra.mxu0 %v663
        %691 = vmatpush.bf16.msra.mxu0 %v662
        %692 = vmatpush.bf16.msra.mxu0 %v661
        %693 = vmatpush.bf16.msra.mxu0 %v660
        %694 = vmatpush.bf16.msra.mxu0 %v659
        %695 = vmatpush.bf16.msra.mxu0 %v658
        %696 = vmatpush.bf16.msra.mxu0 %v657
        %697 = vmatmul.bf16.gmra.mxu0 %v529
        %v698 = vpop.f32.mrf.mxu0
        %v699 = vadd.f32 0.0, %v698
        %v700 = vpop.f32.mrf.mxu0
        %v701 = vadd.f32 0.0, %v700
        %702 = vmatmul.bf16.gmra.mxu0 %v531
        %v703 = vpop.f32.mrf.mxu0
        %v704 = vadd.f32 0.0, %v703
        %v705 = vpop.f32.mrf.mxu0
        %v706 = vadd.f32 0.0, %v705
        %707 = vmatmul.bf16.gmra.mxu0 %v533
        %v708 = vpop.f32.mrf.mxu0
        %v709 = vadd.f32 0.0, %v708
        %v710 = vpop.f32.mrf.mxu0
        %v711 = vadd.f32 0.0, %v710
        %712 = vmatmul.bf16.gmra.mxu0 %v535
        %v713 = vpop.f32.mrf.mxu0
        %v714 = vadd.f32 0.0, %v713
        %v715 = vpop.f32.mrf.mxu0
        %v716 = vadd.f32 0.0, %v715
        %717 = vmatmul.bf16.gmra.mxu0 %v537
        %v718 = vpop.f32.mrf.mxu0
        %v719 = vadd.f32 0.0, %v718
        %v720 = vpop.f32.mrf.mxu0
        %v721 = vadd.f32 0.0, %v720
        %722 = vmatmul.bf16.gmra.mxu0 %v539
        %v723 = vpop.f32.mrf.mxu0
        %v724 = vadd.f32 0.0, %v723
        %v725 = vpop.f32.mrf.mxu0
        %v726 = vadd.f32 0.0, %v725
        %727 = vmatmul.bf16.gmra.mxu0 %v541
        %v728 = vpop.f32.mrf.mxu0
        %v729 = vadd.f32 0.0, %v728
        %v730 = vpop.f32.mrf.mxu0
        %v731 = vadd.f32 0.0, %v730
        %732 = vmatmul.bf16.gmra.mxu0 %v543
        %v733 = vpop.f32.mrf.mxu0
        %v734 = vadd.f32 0.0, %v733
        %v735 = vpop.f32.mrf.mxu0
        %v736 = vadd.f32 0.0, %v735
        %737 = vmatmul.bf16.gmra.mxu0 %v545
        %v738 = vpop.f32.mrf.mxu0
        %v739 = vadd.f32 0.0, %v738
        %v740 = vpop.f32.mrf.mxu0
        %v741 = vadd.f32 0.0, %v740
        %742 = vmatmul.bf16.gmra.mxu0 %v547
        %v743 = vpop.f32.mrf.mxu0
        %v744 = vadd.f32 0.0, %v743
        %v745 = vpop.f32.mrf.mxu0
        %v746 = vadd.f32 0.0, %v745
        %747 = vmatmul.bf16.gmra.mxu0 %v549
        %v748 = vpop.f32.mrf.mxu0
        %v749 = vadd.f32 0.0, %v748
        %v750 = vpop.f32.mrf.mxu0
        %v751 = vadd.f32 0.0, %v750
        %752 = vmatmul.bf16.gmra.mxu0 %v551
        %v753 = vpop.f32.mrf.mxu0
        %v754 = vadd.f32 0.0, %v753
        %v755 = vpop.f32.mrf.mxu0
        %v756 = vadd.f32 0.0, %v755
        %757 = vmatmul.bf16.gmra.mxu0 %v553
        %v758 = vpop.f32.mrf.mxu0
        %v759 = vadd.f32 0.0, %v758
        %v760 = vpop.f32.mrf.mxu0
        %v761 = vadd.f32 0.0, %v760
        %762 = vmatmul.bf16.gmra.mxu0 %v555
        %v763 = vpop.f32.mrf.mxu0
        %v764 = vadd.f32 0.0, %v763
        %v765 = vpop.f32.mrf.mxu0
        %v766 = vadd.f32 0.0, %v765
        %767 = vmatmul.bf16.gmra.mxu0 %v557
        %v768 = vpop.f32.mrf.mxu0
        %v769 = vadd.f32 0.0, %v768
        %v770 = vpop.f32.mrf.mxu0
        %v771 = vadd.f32 0.0, %v770
        %772 = vmatmul.bf16.gmra.mxu0 %v559
        %v773 = vpop.f32.mrf.mxu0
        %v774 = vadd.f32 0.0, %v773
        %v775 = vpop.f32.mrf.mxu0
        %v776 = vadd.f32 0.0, %v775
        %777 = vdwg.mxu0
        %778 = vmatpush.bf16.msra.mxu0 %v672
        %779 = vmatpush.bf16.msra.mxu0 %v671
        %780 = vmatpush.bf16.msra.mxu0 %v670
        %781 = vmatpush.bf16.msra.mxu0 %v669
        %782 = vmatpush.bf16.msra.mxu0 %v668
        %783 = vmatpush.bf16.msra.mxu0 %v667
        %784 = vmatpush.bf16.msra.mxu0 %v666
        %785 = vmatpush.bf16.msra.mxu0 %v665
        %786 = vmatmul.bf16.gmra.mxu0 %v530
        %v787 = vpop.f32.mrf.mxu0
        %v788 = vadd.f32 %v699, %v787
        %v789 = vpop.f32.mrf.mxu0
        %v790 = vadd.f32 %v701, %v789
        %791 = vmatmul.bf16.gmra.mxu0 %v532
        %v792 = vpop.f32.mrf.mxu0
        %v793 = vadd.f32 %v704, %v792
        %v794 = vpop.f32.mrf.mxu0
        %v795 = vadd.f32 %v706, %v794
        %796 = vmatmul.bf16.gmra.mxu0 %v534
        %v797 = vpop.f32.mrf.mxu0
        %v798 = vadd.f32 %v709, %v797
        %v799 = vpop.f32.mrf.mxu0
        %v800 = vadd.f32 %v711, %v799
        %801 = vmatmul.bf16.gmra.mxu0 %v536
        %v802 = vpop.f32.mrf.mxu0
        %v803 = vadd.f32 %v714, %v802
        %v804 = vpop.f32.mrf.mxu0
        %v805 = vadd.f32 %v716, %v804
        %806 = vmatmul.bf16.gmra.mxu0 %v538
        %v807 = vpop.f32.mrf.mxu0
        %v808 = vadd.f32 %v719, %v807
        %v809 = vpop.f32.mrf.mxu0
        %v810 = vadd.f32 %v721, %v809
        %811 = vmatmul.bf16.gmra.mxu0 %v540
        %v812 = vpop.f32.mrf.mxu0
        %v813 = vadd.f32 %v724, %v812
        %v814 = vpop.f32.mrf.mxu0
        %v815 = vadd.f32 %v726, %v814
        %816 = vmatmul.bf16.gmra.mxu0 %v542
        %v817 = vpop.f32.mrf.mxu0
        %v818 = vadd.f32 %v729, %v817
        %v819 = vpop.f32.mrf.mxu0
        %v820 = vadd.f32 %v731, %v819
        %821 = vmatmul.bf16.gmra.mxu0 %v544
        %v822 = vpop.f32.mrf.mxu0
        %v823 = vadd.f32 %v734, %v822
        %v824 = vpop.f32.mrf.mxu0
        %v825 = vadd.f32 %v736, %v824
        %826 = vmatmul.bf16.gmra.mxu0 %v546
        %v827 = vpop.f32.mrf.mxu0
        %v828 = vadd.f32 %v739, %v827
        %v829 = vpop.f32.mrf.mxu0
        %v830 = vadd.f32 %v741, %v829
        %831 = vmatmul.bf16.gmra.mxu0 %v548
        %v832 = vpop.f32.mrf.mxu0
        %v833 = vadd.f32 %v744, %v832
        %v834 = vpop.f32.mrf.mxu0
        %v835 = vadd.f32 %v746, %v834
        %836 = vmatmul.bf16.gmra.mxu0 %v550
        %v837 = vpop.f32.mrf.mxu0
        %v838 = vadd.f32 %v749, %v837
        %v839 = vpop.f32.mrf.mxu0
        %v840 = vadd.f32 %v751, %v839
        %841 = vmatmul.bf16.gmra.mxu0 %v552
        %v842 = vpop.f32.mrf.mxu0
        %v843 = vadd.f32 %v754, %v842
        %v844 = vpop.f32.mrf.mxu0
        %v845 = vadd.f32 %v756, %v844
        %846 = vmatmul.bf16.gmra.mxu0 %v554
        %v847 = vpop.f32.mrf.mxu0
        %v848 = vadd.f32 %v759, %v847
        %v849 = vpop.f32.mrf.mxu0
        %v850 = vadd.f32 %v761, %v849
        %851 = vmatmul.bf16.gmra.mxu0 %v556
        %v852 = vpop.f32.mrf.mxu0
        %v853 = vadd.f32 %v764, %v852
        %v854 = vpop.f32.mrf.mxu0
        %v855 = vadd.f32 %v766, %v854
        %856 = vmatmul.bf16.gmra.mxu0 %v558
        %v857 = vpop.f32.mrf.mxu0
        %v858 = vadd.f32 %v769, %v857
        %v859 = vpop.f32.mrf.mxu0
        %v860 = vadd.f32 %v771, %v859
        %861 = vmatmul.bf16.gmra.mxu0 %v560
        %v862 = vpop.f32.mrf.mxu0
        %v863 = vadd.f32 %v774, %v862
        %v864 = vpop.f32.mrf.mxu0
        %v865 = vadd.f32 %v776, %v864
        %866 = vdwg.mxu0
        %v867 = vadd.f32 %v337, %v788
        %v868 = vadd.f32 %v338, %v790
        %v869 = vadd.f32 %v339, %v793
        %v870 = vadd.f32 %v340, %v795
        %v871 = vadd.f32 %v341, %v798
        %v872 = vadd.f32 %v342, %v800
        %v873 = vadd.f32 %v343, %v803
        %v874 = vadd.f32 %v344, %v805
        %v875 = vadd.f32 %v345, %v808
        %v876 = vadd.f32 %v346, %v810
        %v877 = vadd.f32 %v347, %v813
        %v878 = vadd.f32 %v348, %v815
        %v879 = vadd.f32 %v349, %v818
        %v880 = vadd.f32 %v350, %v820
        %v881 = vadd.f32 %v351, %v823
        %v882 = vadd.f32 %v352, %v825
        %v883 = vadd.f32 %v353, %v828
        %v884 = vadd.f32 %v354, %v830
        %v885 = vadd.f32 %v355, %v833
        %v886 = vadd.f32 %v356, %v835
        %v887 = vadd.f32 %v357, %v838
        %v888 = vadd.f32 %v358, %v840
        %v889 = vadd.f32 %v359, %v843
        %v890 = vadd.f32 %v360, %v845
        %v891 = vadd.f32 %v361, %v848
        %v892 = vadd.f32 %v362, %v850
        %v893 = vadd.f32 %v363, %v853
        %v894 = vadd.f32 %v364, %v855
        %v895 = vadd.f32 %v365, %v858
        %v896 = vadd.f32 %v366, %v860
        %v897 = vadd.f32 %v367, %v863
        %v898 = vadd.f32 %v368, %v865
        %vm899 = vcmask 523264
        %900 = vst.msk [vmem:[#allocation2] sm:$0xff] %vm899, %v867
        %901 = vst.msk [vmem:[#allocation2 + $0x8] sm:$0xff] %vm899, %v868
        %902 = vst.msk [vmem:[#allocation2 + $0x10] sm:$0xff] %vm899, %v869
        %903 = vst.msk [vmem:[#allocation2 + $0x18] sm:$0xff] %vm899, %v870
        %904 = vst.msk [vmem:[#allocation2 + $0x20] sm:$0xff] %vm899, %v871
        %905 = vst.msk [vmem:[#allocation2 + $0x28] sm:$0xff] %vm899, %v872
        %906 = vst.msk [vmem:[#allocation2 + $0x30] sm:$0xff] %vm899, %v873
        %907 = vst.msk [vmem:[#allocation2 + $0x38] sm:$0xff] %vm899, %v874
        %908 = vst.msk [vmem:[#allocation2 + $0x40] sm:$0xff] %vm899, %v875
        %909 = vst.msk [vmem:[#allocation2 + $0x48] sm:$0xff] %vm899, %v876
        %910 = vst.msk [vmem:[#allocation2 + $0x50] sm:$0xff] %vm899, %v877
        %911 = vst.msk [vmem:[#allocation2 + $0x58] sm:$0xff] %vm899, %v878
        %912 = vst.msk [vmem:[#allocation2 + $0x60] sm:$0xff] %vm899, %v879
        %913 = vst.msk [vmem:[#allocation2 + $0x68] sm:$0xff] %vm899, %v880
        %914 = vst.msk [vmem:[#allocation2 + $0x70] sm:$0xff] %vm899, %v881
        %915 = vst.msk [vmem:[#allocation2 + $0x78] sm:$0xff] %vm899, %v882
        %916 = vst.msk [vmem:[#allocation2 + $0x80] sm:$0xff] %vm899, %v883
        %917 = vst.msk [vmem:[#allocation2 + $0x88] sm:$0xff] %vm899, %v884
        %918 = vst.msk [vmem:[#allocation2 + $0x90] sm:$0xff] %vm899, %v885
        %919 = vst.msk [vmem:[#allocation2 + $0x98] sm:$0xff] %vm899, %v886
        %920 = vst.msk [vmem:[#allocation2 + $0xa0] sm:$0xff] %vm899, %v887
        %921 = vst.msk [vmem:[#allocation2 + $0xa8] sm:$0xff] %vm899, %v888
        %922 = vst.msk [vmem:[#allocation2 + $0xb0] sm:$0xff] %vm899, %v889
        %923 = vst.msk [vmem:[#allocation2 + $0xb8] sm:$0xff] %vm899, %v890
        %924 = vst.msk [vmem:[#allocation2 + $0xc0] sm:$0xff] %vm899, %v891
        %925 = vst.msk [vmem:[#allocation2 + $0xc8] sm:$0xff] %vm899, %v892
        %926 = vst.msk [vmem:[#allocation2 + $0xd0] sm:$0xff] %vm899, %v893
        %927 = vst.msk [vmem:[#allocation2 + $0xd8] sm:$0xff] %vm899, %v894
        %928 = vst.msk [vmem:[#allocation2 + $0xe0] sm:$0xff] %vm899, %v895
        %929 = vst.msk [vmem:[#allocation2 + $0xe8] sm:$0xff] %vm899, %v896
        %930 = vst.msk [vmem:[#allocation2 + $0xf0] sm:$0xff] %vm899, %v897
        %931 = vst.msk [vmem:[#allocation2 + $0xf8] sm:$0xff] %vm899, %v898
        // Predicated region
        $region41: #{conv_bn.1} parent=35 // pred_check
          %p932 = pneg %p300
        $region42: #{conv_bn.1} parent=35 // pred_check_branch
          %934 = sbr.rel (%p932) target = $region44
        $region43: #{conv_bn.1} parent=35 // pred_region
          %v935 = vld [vmem:[#allocation2] sm:$0xff]
          %v936 = vld [vmem:[#allocation2 + $0x8] sm:$0xff]
          %v937 = vld [vmem:[#allocation2 + $0x10] sm:$0xff]
          %v938 = vld [vmem:[#allocation2 + $0x18] sm:$0xff]
          %v939 = vld [vmem:[#allocation2 + $0x20] sm:$0xff]
          %v940 = vld [vmem:[#allocation2 + $0x28] sm:$0xff]
          %v941 = vld [vmem:[#allocation2 + $0x30] sm:$0xff]
          %v942 = vld [vmem:[#allocation2 + $0x38] sm:$0xff]
          %v943 = vld [vmem:[#allocation2 + $0x40] sm:$0xff]
          %v944 = vld [vmem:[#allocation2 + $0x48] sm:$0xff]
          %v945 = vld [vmem:[#allocation2 + $0x50] sm:$0xff]
          %v946 = vld [vmem:[#allocation2 + $0x58] sm:$0xff]
          %v947 = vld [vmem:[#allocation2 + $0x60] sm:$0xff]
          %v948 = vld [vmem:[#allocation2 + $0x68] sm:$0xff]
          %v949 = vld [vmem:[#allocation2 + $0x70] sm:$0xff]
          %v950 = vld [vmem:[#allocation2 + $0x78] sm:$0xff]
          %v951 = vld [vmem:[#allocation2 + $0x80] sm:$0xff]
          %v952 = vld [vmem:[#allocation2 + $0x88] sm:$0xff]
          %v953 = vld [vmem:[#allocation2 + $0x90] sm:$0xff]
          %v954 = vld [vmem:[#allocation2 + $0x98] sm:$0xff]
          %v955 = vld [vmem:[#allocation2 + $0xa0] sm:$0xff]
          %v956 = vld [vmem:[#allocation2 + $0xa8] sm:$0xff]
          %v957 = vld [vmem:[#allocation2 + $0xb0] sm:$0xff]
          %v958 = vld [vmem:[#allocation2 + $0xb8] sm:$0xff]
          %v959 = vld [vmem:[#allocation2 + $0xc0] sm:$0xff]
          %v960 = vld [vmem:[#allocation2 + $0xc8] sm:$0xff]
          %v961 = vld [vmem:[#allocation2 + $0xd0] sm:$0xff]
          %v962 = vld [vmem:[#allocation2 + $0xd8] sm:$0xff]
          %v963 = vld [vmem:[#allocation2 + $0xe0] sm:$0xff]
          %v964 = vld [vmem:[#allocation2 + $0xe8] sm:$0xff]
          %v965 = vld [vmem:[#allocation2 + $0xf0] sm:$0xff]
          %v966 = vld [vmem:[#allocation2 + $0xf8] sm:$0xff]
          %v967 = vld [vmem:[%s295] sm:$0x1]
          %v969 = vperm.slane %v967, 0
          %v971 = vmul.f32 %v935, %v969
          %v972 = vmul.f32 %v936, %v969
          %v973 = vmul.f32 %v937, %v969
          %v974 = vmul.f32 %v938, %v969
          %v975 = vmul.f32 %v939, %v969
          %v976 = vmul.f32 %v940, %v969
          %v977 = vmul.f32 %v941, %v969
          %v978 = vmul.f32 %v942, %v969
          %v979 = vmul.f32 %v943, %v969
          %v980 = vmul.f32 %v944, %v969
          %v981 = vmul.f32 %v945, %v969
          %v982 = vmul.f32 %v946, %v969
          %v983 = vmul.f32 %v947, %v969
          %v984 = vmul.f32 %v948, %v969
          %v985 = vmul.f32 %v949, %v969
          %v986 = vmul.f32 %v950, %v969
          %v987 = vmul.f32 %v951, %v969
          %v988 = vmul.f32 %v952, %v969
          %v989 = vmul.f32 %v953, %v969
          %v990 = vmul.f32 %v954, %v969
          %v991 = vmul.f32 %v955, %v969
          %v992 = vmul.f32 %v956, %v969
          %v993 = vmul.f32 %v957, %v969
          %v994 = vmul.f32 %v958, %v969
          %v995 = vmul.f32 %v959, %v969
          %v996 = vmul.f32 %v960, %v969
          %v997 = vmul.f32 %v961, %v969
          %v998 = vmul.f32 %v962, %v969
          %v999 = vmul.f32 %v963, %v969
          %v1000 = vmul.f32 %v964, %v969
          %v1001 = vmul.f32 %v965, %v969
          %v1002 = vmul.f32 %v966, %v969
          %v1003 = vld [vmem:[%s298] sm:$0x1]
          %v1005 = vperm.slane %v1003, 0
          %v1007 = vadd.f32 %v971, %v1005
          %v1008 = vadd.f32 %v972, %v1005
          %v1009 = vadd.f32 %v973, %v1005
          %v1010 = vadd.f32 %v974, %v1005
          %v1011 = vadd.f32 %v975, %v1005
          %v1012 = vadd.f32 %v976, %v1005
          %v1013 = vadd.f32 %v977, %v1005
          %v1014 = vadd.f32 %v978, %v1005
          %v1015 = vadd.f32 %v979, %v1005
          %v1016 = vadd.f32 %v980, %v1005
          %v1017 = vadd.f32 %v981, %v1005
          %v1018 = vadd.f32 %v982, %v1005
          %v1019 = vadd.f32 %v983, %v1005
          %v1020 = vadd.f32 %v984, %v1005
          %v1021 = vadd.f32 %v985, %v1005
          %v1022 = vadd.f32 %v986, %v1005
          %v1023 = vadd.f32 %v987, %v1005
          %v1024 = vadd.f32 %v988, %v1005
          %v1025 = vadd.f32 %v989, %v1005
          %v1026 = vadd.f32 %v990, %v1005
          %v1027 = vadd.f32 %v991, %v1005
          %v1028 = vadd.f32 %v992, %v1005
          %v1029 = vadd.f32 %v993, %v1005
          %v1030 = vadd.f32 %v994, %v1005
          %v1031 = vadd.f32 %v995, %v1005
          %v1032 = vadd.f32 %v996, %v1005
          %v1033 = vadd.f32 %v997, %v1005
          %v1034 = vadd.f32 %v998, %v1005
          %v1035 = vadd.f32 %v999, %v1005
          %v1036 = vadd.f32 %v1000, %v1005
          %v1037 = vadd.f32 %v1001, %v1005
          %v1038 = vadd.f32 %v1002, %v1005
          %v1039 = vmax.f32 %v1007, 0.0
          %v1040 = vmax.f32 %v1008, 0.0
          %v1041 = vmax.f32 %v1009, 0.0
          %v1042 = vmax.f32 %v1010, 0.0
          %v1043 = vmax.f32 %v1011, 0.0
          %v1044 = vmax.f32 %v1012, 0.0
          %v1045 = vmax.f32 %v1013, 0.0
          %v1046 = vmax.f32 %v1014, 0.0
          %v1047 = vmax.f32 %v1015, 0.0
          %v1048 = vmax.f32 %v1016, 0.0
          %v1049 = vmax.f32 %v1017, 0.0
          %v1050 = vmax.f32 %v1018, 0.0
          %v1051 = vmax.f32 %v1019, 0.0
          %v1052 = vmax.f32 %v1020, 0.0
          %v1053 = vmax.f32 %v1021, 0.0
          %v1054 = vmax.f32 %v1022, 0.0
          %v1055 = vmax.f32 %v1023, 0.0
          %v1056 = vmax.f32 %v1024, 0.0
          %v1057 = vmax.f32 %v1025, 0.0
          %v1058 = vmax.f32 %v1026, 0.0
          %v1059 = vmax.f32 %v1027, 0.0
          %v1060 = vmax.f32 %v1028, 0.0
          %v1061 = vmax.f32 %v1029, 0.0
          %v1062 = vmax.f32 %v1030, 0.0
          %v1063 = vmax.f32 %v1031, 0.0
          %v1064 = vmax.f32 %v1032, 0.0
          %v1065 = vmax.f32 %v1033, 0.0
          %v1066 = vmax.f32 %v1034, 0.0
          %v1067 = vmax.f32 %v1035, 0.0
          %v1068 = vmax.f32 %v1036, 0.0
          %v1069 = vmax.f32 %v1037, 0.0
          %v1070 = vmax.f32 %v1038, 0.0
          %v1071 = vpack.c.bf16 %v1039, %v1039
          %v1072 = vpack.c.bf16 %v1040, %v1040
          %v1073 = vpack.c.bf16 %v1041, %v1041
          %v1074 = vpack.c.bf16 %v1042, %v1042
          %v1075 = vpack.c.bf16 %v1043, %v1043
          %v1076 = vpack.c.bf16 %v1044, %v1044
          %v1077 = vpack.c.bf16 %v1045, %v1045
          %v1078 = vpack.c.bf16 %v1046, %v1046
          %v1079 = vpack.c.bf16 %v1047, %v1047
          %v1080 = vpack.c.bf16 %v1048, %v1048
          %v1081 = vpack.c.bf16 %v1049, %v1049
          %v1082 = vpack.c.bf16 %v1050, %v1050
          %v1083 = vpack.c.bf16 %v1051, %v1051
          %v1084 = vpack.c.bf16 %v1052, %v1052
          %v1085 = vpack.c.bf16 %v1053, %v1053
          %v1086 = vpack.c.bf16 %v1054, %v1054
          %v1087 = vpack.c.bf16 %v1055, %v1055
          %v1088 = vpack.c.bf16 %v1056, %v1056
          %v1089 = vpack.c.bf16 %v1057, %v1057
          %v1090 = vpack.c.bf16 %v1058, %v1058
          %v1091 = vpack.c.bf16 %v1059, %v1059
          %v1092 = vpack.c.bf16 %v1060, %v1060
          %v1093 = vpack.c.bf16 %v1061, %v1061
          %v1094 = vpack.c.bf16 %v1062, %v1062
          %v1095 = vpack.c.bf16 %v1063, %v1063
          %v1096 = vpack.c.bf16 %v1064, %v1064
          %v1097 = vpack.c.bf16 %v1065, %v1065
          %v1098 = vpack.c.bf16 %v1066, %v1066
          %v1099 = vpack.c.bf16 %v1067, %v1067
          %v1100 = vpack.c.bf16 %v1068, %v1068
          %v1101 = vpack.c.bf16 %v1069, %v1069
          %v1102 = vpack.c.bf16 %v1070, %v1070
          %vm1103 = vcmask 519168
          %1104 = vst.msk [vmem:[%s271] sm:$0xf] %vm1103, %v1071
          %1105 = vst.msk [vmem:[%s271 + $0x4] sm:$0xf] %vm1103, %v1072
          %1106 = vst.msk [vmem:[%s271 + $0x8] sm:$0xf] %vm1103, %v1073
          %1107 = vst.msk [vmem:[%s271 + $0xc] sm:$0xf] %vm1103, %v1074
          %1108 = vst.msk [vmem:[%s271 + $0x10] sm:$0xf] %vm1103, %v1075
          %1109 = vst.msk [vmem:[%s271 + $0x14] sm:$0xf] %vm1103, %v1076
          %1110 = vst.msk [vmem:[%s271 + $0x18] sm:$0xf] %vm1103, %v1077
          %1111 = vst.msk [vmem:[%s271 + $0x1c] sm:$0xf] %vm1103, %v1078
          %1112 = vst.msk [vmem:[%s271 + $0x20] sm:$0xf] %vm1103, %v1079
          %1113 = vst.msk [vmem:[%s271 + $0x24] sm:$0xf] %vm1103, %v1080
          %1114 = vst.msk [vmem:[%s271 + $0x28] sm:$0xf] %vm1103, %v1081
          %1115 = vst.msk [vmem:[%s271 + $0x2c] sm:$0xf] %vm1103, %v1082
          %1116 = vst.msk [vmem:[%s271 + $0x30] sm:$0xf] %vm1103, %v1083
          %1117 = vst.msk [vmem:[%s271 + $0x34] sm:$0xf] %vm1103, %v1084
          %1118 = vst.msk [vmem:[%s271 + $0x38] sm:$0xf] %vm1103, %v1085
          %1119 = vst.msk [vmem:[%s271 + $0x3c] sm:$0xf] %vm1103, %v1086
          %1120 = vst.msk [vmem:[%s271 + $0x40] sm:$0xf] %vm1103, %v1087
          %1121 = vst.msk [vmem:[%s271 + $0x44] sm:$0xf] %vm1103, %v1088
          %1122 = vst.msk [vmem:[%s271 + $0x48] sm:$0xf] %vm1103, %v1089
          %1123 = vst.msk [vmem:[%s271 + $0x4c] sm:$0xf] %vm1103, %v1090
          %1124 = vst.msk [vmem:[%s271 + $0x50] sm:$0xf] %vm1103, %v1091
          %1125 = vst.msk [vmem:[%s271 + $0x54] sm:$0xf] %vm1103, %v1092
          %1126 = vst.msk [vmem:[%s271 + $0x58] sm:$0xf] %vm1103, %v1093
          %1127 = vst.msk [vmem:[%s271 + $0x5c] sm:$0xf] %vm1103, %v1094
          %1128 = vst.msk [vmem:[%s271 + $0x60] sm:$0xf] %vm1103, %v1095
          %1129 = vst.msk [vmem:[%s271 + $0x64] sm:$0xf] %vm1103, %v1096
          %1130 = vst.msk [vmem:[%s271 + $0x68] sm:$0xf] %vm1103, %v1097
          %1131 = vst.msk [vmem:[%s271 + $0x6c] sm:$0xf] %vm1103, %v1098
          %1132 = vst.msk [vmem:[%s271 + $0x70] sm:$0xf] %vm1103, %v1099
          %1133 = vst.msk [vmem:[%s271 + $0x74] sm:$0xf] %vm1103, %v1100
          %1134 = vst.msk [vmem:[%s271 + $0x78] sm:$0xf] %vm1103, %v1101
          %1135 = vst.msk [vmem:[%s271 + $0x7c] sm:$0xf] %vm1103, %v1102
        $region44: #{conv_bn.1} parent=35 // pred_fallthru
          _
        %s1136 = sand.u32 %s155, 1
        %s1137 = scalar_lea.sflag [#allocation4], %s1136
        %s1138 = sand.u32 %s155, 1
        %s1139 = smul.addr %s1138, 128
        %s1140 = scalar_lea.vmem [#allocation3], %s1139
        // Predicated region
        $region45: #{conv_bn.1} parent=35 // pred_check
          %p1141 = pneg %p165
        $region46: #{conv_bn.1} parent=35 // pred_check_branch
          %1143 = sbr.rel (%p1141) target = $region48
        $region47: #{conv_bn.1} parent=35 // pred_region
          %s1144 = smul.u32 32, %s23
          %1146 = vsyncadd %s1137, 0
          %s1147 = sadd.s32 %s24, %s1144
          %s1148 = smul.addr %s1147, 4
          %s1149 = scalar_lea.hbm %s4, %s1148
          %s1150 = sshll.u32 %s1140, 4
          %s1151 = int_to_ptr.vmem [resolvable:$true] %s1150
          %s1152 = sshll.u32 %s1149, 4
          %s1153 = int_to_ptr.hbm [resolvable:$true] %s1152
          %1158 = dma.vmem_to_hbm [thread:$0]  %s1151, 2048, %s1153, %s1137, 64, 64, 4
        $region48: #{conv_bn.1} parent=35 // pred_fallthru
          _
      $region36: #{conv_bn.1} parent=5 // pred_fallthru
        _
      %p1159 = scmp.le.s32.totalorder 2, %s13
      // Predicated region
      $region49: #{conv_bn.1} parent=5 // pred_check
        %p1160 = pneg %p1159
      $region50: #{conv_bn.1} parent=5 // pred_check_branch
        %1162 = sbr.rel (%p1160) target = $region52
      $region51: #{conv_bn.1} parent=5 // pred_region
        %s1163 = ssub.s32 %s13, 2
        // Predicated region
        $region53: #{conv_bn.1} parent=51 // pred_check
          %p1164 = pneg %p171
        $region54: #{conv_bn.1} parent=51 // pred_check_branch
          %1166 = sbr.rel (%p1164) target = $region56
        $region55: #{conv_bn.1} parent=51 // pred_region
          %s1167 = sand.u32 %s156, 1
          %s1168 = scalar_lea.sflag [#allocation4], %s1167
          %s1169 = sand.u32 %s156, 1
          %s1170 = smul.addr %s1169, 128
          %s1171 = scalar_lea.vmem [#allocation3], %s1170
          %1173 = dma.done %s1168, 2048
        $region56: #{conv_bn.1} parent=51 // pred_fallthru
          _
      $region52: #{conv_bn.1} parent=5 // pred_fallthru
        _
    $region6: #{conv_bn.1} parent=1 // loop_footer
      %s17 = sadd.s32 1, %s13
    $region7: #{conv_bn.1} parent=1 // loop_footer_branch
      %12 = sbr.rel target = $region3
    $region8: #{conv_bn.1} parent=1 // loop_exit
      _
    %1174 = vsyncpa [#allocation4], 1
    %s1175 = scalar_lea.sflag [#allocation4], 1
    %1176 = vsyncpa %s1175, 1

</llo_original>
